<compile_context>
chip_gen: v7x
topology: tpu7x:2x2x1
jax: 0.10.0
libtpu: 0.0.40
codegen_flags: <defaults>
</compile_context>

<pallas_src>
import jax
import jax.numpy as jnp
from jax.experimental import pallas as pl
from jax.experimental.pallas import tpu as pltpu

_REGION = 27 * 27          # one 27x27 pooling region == three nested MaxPool2d(3)


def _round_up(x, m):
    return ((x + m - 1) // m) * m


def mock_cls_kernel(x_ref, w_ref, b_ref, out_ref):
    # x_ref:   (TB, F*729)  batch rows along sublanes; per-feature 27x27 regions
    #                       concatenated (unpadded) along lanes.
    # w_ref:   (F, N)       fc weight transposed (resident across the grid).
    # b_ref:   (1, N)       fc bias (resident).
    # out_ref: (TB, N)
    F = w_ref.shape[0]
    R = x_ref.shape[1] // F                            # 729
    w = w_ref[...]
    out = b_ref[...]                                   # (1, N), broadcasts over TB
    for f in range(F):                                 # F == 3, fully unrolled; VPU only
        # max over one 27x27 region == 3x MaxPool2d(3) composed on that region
        pooled_f = jnp.max(x_ref[:, f * R:(f + 1) * R], axis=-1, keepdims=True)  # (TB,1)
        out = out + pooled_f * w[f:f + 1, :]                                      # (TB,N)
    out_ref[...] = out.astype(out_ref.dtype)


def mock_cls_forward(img, fc_w, fc_b):
    """img: (B, C, H, W) float32 (NCHW, like PyTorch). fc_w: (10, 3), fc_b: (10,)."""
    B, C, H, W = img.shape
    N, F_in = fc_w.shape

    # Three MaxPool2d(3): each floors spatial dims by 3 (PyTorch default stride=kernel).
    h3 = ((H // 3) // 3) // 3
    w3 = ((W // 3) // 3) // 3
    assert h3 >= 1 and w3 >= 1, "input too small for three MaxPool2d(3)"
    F = C * h3 * w3
    assert F == F_in, f"flattened features {F} must equal fc in-features {F_in}"

    crop = img[:, :, :27 * h3, :27 * w3]
    if h3 == 1 and w3 == 1:
        # No transpose: flattened-feature order == channel order -> free reshape,
        # and each feature's 27x27 pooling region is a contiguous 729-lane run.
        x2 = crop.reshape(B, F * _REGION)
    else:
        # Rare fallback (only reachable when C < 3): carve 27x27 blocks explicitly.
        regions = crop.reshape(B, C, h3, 27, w3, 27).transpose(0, 1, 2, 4, 3, 5)
        x2 = regions.reshape(B, F * _REGION)

    w_t = fc_w.T                                       # (F, N)
    b2 = fc_b.reshape(1, -1)                           # (1, N)

    # Batch tile:
    #  * tiny B: single step (block equals full batch extent).
    #  * large B: at least 2 grid steps so "parallel" shards across v7x's 2 TCs;
    #    TB <= 1024 -> (1024, 2187) f32 double-buffered ~= 18 MiB, fits every gen
    #    (including v7x's 64 MiB VMEM).
    if B <= 16:
        TB = B
    else:
        TB = min(1024, _round_up(pl.cdiv(B, 2), 8))
    grid = (pl.cdiv(B, TB),)

    return pl.pallas_call(
        mock_cls_kernel,
        out_shape=jax.ShapeDtypeStruct((B, N), jnp.float32),
        grid_spec=pltpu.PrefetchScalarGridSpec(
            num_scalar_prefetch=0,
            grid=grid,
            in_specs=[
                pl.BlockSpec((TB, F * _REGION), lambda i: (i, 0)),  # batch tile
                pl.BlockSpec((F, N), lambda i: (0, 0)),             # weight (resident)
                pl.BlockSpec((1, N), lambda i: (0, 0)),             # bias (resident)
            ],
            out_specs=pl.BlockSpec((TB, N), lambda i: (i, 0)),
        ),
        compiler_params=pltpu.CompilerParams(
            dimension_semantics=("parallel",),          # megacore split on v7x
            vmem_limit_bytes=48 * 1024 * 1024),         # <= v7x's 64 MiB physical
    )(x2, w_t, b2)


if __name__ == "__main__":
    key = jax.random.PRNGKey(0)
    k_img, k_w, k_b = jax.random.split(key, 3)

    # Input consistent with the module: (B, C, H, W) = (2, 3, 27, 27)
    # -> pool1 (9x9) -> pool2 (3x3) -> pool3 (1x1) -> flatten to 3 -> Linear(3, 10)
    B, C, H, W = 2, 3, 27, 27
    img = jax.random.normal(k_img, (B, C, H, W), dtype=jnp.float32)

    # Deterministic Linear(3, 10) params (PyTorch-style uniform init, bound = 1/sqrt(3)).
    bound = 1.0 / jnp.sqrt(3.0)
    fc_w = jax.random.uniform(k_w, (10, 3), minval=-bound, maxval=bound, dtype=jnp.float32)
    fc_b = jax.random.uniform(k_b, (10,), minval=-bound, maxval=bound, dtype=jnp.float32)

    out = jax.block_until_ready(mock_cls_forward(img, fc_w, fc_b))

    # Pure-JAX reference matching the PyTorch module exactly:
    # three MaxPool2d(3) -> flatten -> Linear.
    def maxpool3(x):
        b, c, h, w = x.shape
        ho, wo = h // 3, w // 3
        x = x[:, :, :ho * 3, :wo * 3].reshape(b, c, ho, 3, wo, 3)
        return x.max(axis=(3, 5))

    pooled = maxpool3(maxpool3(maxpool3(img)))
    ref = pooled.reshape(B, -1) @ fc_w.T + fc_b

    assert out.shape == (B, 10)
    assert jnp.allclose(out, ref, atol=1e-5), "mismatch vs reference"
    print("KERNEL_OK")
</pallas_src>

<mosaic_0001>
module attributes {stable_mosaic.version = 11 : i64} {
  func.func @mock_cls_kernel(%arg0: i32, %arg1: memref<2x2187xf32, #tpu.memory_space<vmem>>, %arg2: memref<3x10xf32, #tpu.memory_space<vmem>>, %arg3: memref<1x10xf32, #tpu.memory_space<vmem>>, %arg4: memref<2x10xf32, #tpu.memory_space<vmem>>) attributes {dimension_semantics = [#tpu.dimension_semantics<parallel>], iteration_bounds = array<i64: 1>, scalar_prefetch = 0 : i64, scratch_operands = 0 : i64, tpu.core_type = #tpu.core_type<tc>, window_params = [{transform_indices = @transform_0, window_bounds = array<i64: 2, 2187>}, {pipeline_mode = #tpu.pipeline_mode<synchronous>, transform_indices = @transform_1, window_bounds = array<i64: 3, 10>}, {pipeline_mode = #tpu.pipeline_mode<synchronous>, transform_indices = @transform_2, window_bounds = array<i64: 1, 10>}, {transform_indices = @transform_3, window_bounds = array<i64: 2, 10>}]} {
    %c0 = arith.constant 0 : index
    %c0_0 = arith.constant 0 : index
    %0 = vector.load %arg2[%c0, %c0_0] : memref<3x10xf32, #tpu.memory_space<vmem>>, vector<3x10xf32>
    %c0_1 = arith.constant 0 : index
    %c0_2 = arith.constant 0 : index
    %1 = vector.load %arg3[%c0_1, %c0_2] : memref<1x10xf32, #tpu.memory_space<vmem>>, vector<1x10xf32>
    %c0_3 = arith.constant 0 : index
    %c0_4 = arith.constant 0 : index
    %2 = vector.load %arg1[%c0_3, %c0_4] : memref<2x2187xf32, #tpu.memory_space<vmem>>, vector<2x729xf32>
    %cst = arith.constant dense<0xFF800000> : vector<2xf32>
    %3 = vector.multi_reduction <maximumf>, %2, %cst [1] : vector<2x729xf32> to vector<2xf32>
    %4 = vector.shape_cast %3 : vector<2xf32> to vector<2x1xf32>
    %5 = vector.extract_strided_slice %0 {offsets = [0, 0], sizes = [1, 10], strides = [1, 1]} : vector<3x10xf32> to vector<1x10xf32>
    %6 = vector.broadcast %4 : vector<2x1xf32> to vector<2x10xf32>
    %7 = vector.broadcast %5 : vector<1x10xf32> to vector<2x10xf32>
    %8 = arith.mulf %6, %7 : vector<2x10xf32>
    %9 = vector.broadcast %1 : vector<1x10xf32> to vector<2x10xf32>
    %10 = arith.addf %9, %8 : vector<2x10xf32>
    %c0_5 = arith.constant 0 : index
    %c729 = arith.constant 729 : index
    %11 = vector.load %arg1[%c0_5, %c729] : memref<2x2187xf32, #tpu.memory_space<vmem>>, vector<2x729xf32>
    %cst_6 = arith.constant dense<0xFF800000> : vector<2xf32>
    %12 = vector.multi_reduction <maximumf>, %11, %cst_6 [1] : vector<2x729xf32> to vector<2xf32>
    %13 = vector.shape_cast %12 : vector<2xf32> to vector<2x1xf32>
    %14 = vector.extract_strided_slice %0 {offsets = [1, 0], sizes = [1, 10], strides = [1, 1]} : vector<3x10xf32> to vector<1x10xf32>
    %15 = vector.broadcast %13 : vector<2x1xf32> to vector<2x10xf32>
    %16 = vector.broadcast %14 : vector<1x10xf32> to vector<2x10xf32>
    %17 = arith.mulf %15, %16 : vector<2x10xf32>
    %18 = arith.addf %10, %17 : vector<2x10xf32>
    %c0_7 = arith.constant 0 : index
    %c1458 = arith.constant 1458 : index
    %19 = vector.load %arg1[%c0_7, %c1458] : memref<2x2187xf32, #tpu.memory_space<vmem>>, vector<2x729xf32>
    %cst_8 = arith.constant dense<0xFF800000> : vector<2xf32>
    %20 = vector.multi_reduction <maximumf>, %19, %cst_8 [1] : vector<2x729xf32> to vector<2xf32>
    %21 = vector.shape_cast %20 : vector<2xf32> to vector<2x1xf32>
    %22 = vector.extract_strided_slice %0 {offsets = [2, 0], sizes = [1, 10], strides = [1, 1]} : vector<3x10xf32> to vector<1x10xf32>
    %23 = vector.broadcast %21 : vector<2x1xf32> to vector<2x10xf32>
    %24 = vector.broadcast %22 : vector<1x10xf32> to vector<2x10xf32>
    %25 = arith.mulf %23, %24 : vector<2x10xf32>
    %26 = arith.addf %18, %25 : vector<2x10xf32>
    %c0_9 = arith.constant 0 : index
    %c0_10 = arith.constant 0 : index
    %27 = vector.load %arg4[%c0_9, %c0_10] : memref<2x10xf32, #tpu.memory_space<vmem>>, vector<2x10xf32>
    tpu.vector_store %arg4[%c0_9, %c0_10], %26 {strides = array<i32>} : memref<2x10xf32, #tpu.memory_space<vmem>>, vector<2x10xf32>,
    return
  }
  func.func @transform_0(%arg0: i32) -> (i32, i32) {
    %c0_i32 = arith.constant 0 : i32
    %c0_i32_0 = arith.constant 0 : i32
    return %arg0, %c0_i32 : i32, i32
  }
  func.func @transform_1(%arg0: i32) -> (i32, i32) {
    %c0_i32 = arith.constant 0 : i32
    %c0_i32_0 = arith.constant 0 : i32
    %c0_i32_1 = arith.constant 0 : i32
    return %c0_i32, %c0_i32_0 : i32, i32
  }
  func.func @transform_2(%arg0: i32) -> (i32, i32) {
    %c0_i32 = arith.constant 0 : i32
    %c0_i32_0 = arith.constant 0 : i32
    %c0_i32_1 = arith.constant 0 : i32
    return %c0_i32, %c0_i32_0 : i32, i32
  }
  func.func @transform_3(%arg0: i32) -> (i32, i32) {
    %c0_i32 = arith.constant 0 : i32
    %c0_i32_0 = arith.constant 0 : i32
    return %arg0, %c0_i32 : i32, i32
  }
}

</mosaic_0001>

<llo_original>
// kernel: tpu_custom_call.1
$region0: #{tpu_custom_call.1}
  #allocation0 [shape = 'u32[]', space=smem, size = 0x4, offset = 0x4, fixed_abs, tag = 'smem constant byte address 0x4 - core index']
  #allocation1 [shape = 'u32[144,128]{1,0:T(1,128)}', space=vmem, size = 0x12000, scoped, tag = 'internal scratch']
  %s0 = inlined_call_operand.hbm [shape: f32[2,2187], index: 0, kind: input, shape index: {}]
  %s1 = inlined_call_operand.hbm [shape: f32[3,10], index: 1, kind: input, shape index: {}]
  %s2 = inlined_call_operand.vmem [shape: f32[1,10], index: 2, kind: input, shape index: {}]
  %s3 = inlined_call_operand.hbm [shape: f32[2,10], index: 3, kind: output, shape index: {}]
  %s4 = sld [smem:[#allocation0]]
  $region30: #{tpu_custom_call.1} parent=0
    _
  %s6 = ssub.s32 1, %s4
  %s7 = scalar_select 0, %s6, %s4
  $region1: #{tpu_custom_call.1} parent=0
    #allocation2 [shape = 'u8[18432]{0}', space=vmem, size = 0x4800, scoped, tag = 'input window, operand 0, single buffered']
    #allocation3 [shape = 's32[1]{0}', space=sflag, size = 0x4, scoped, tag = 'scoped memory for tpu_custom_call.1']
    #allocation4 [shape = 's32[1]{0}', space=sflag, size = 0x4, scoped, tag = 'scoped memory for tpu_custom_call.1']
    #allocation5 [shape = 'u8[2048]{0}', space=vmem, size = 0x800, scoped, tag = 'input window, operand 1, single buffered']
    #allocation6 [shape = 's32[1]{0}', space=sflag, size = 0x4, scoped, tag = 'scoped memory for tpu_custom_call.1']
    #allocation7 [shape = 'u8[1024]{0}', space=vmem, size = 0x400, scoped, tag = 'output window, operand 0, single buffered']
    %8 = vsyncpa [#allocation3], 0
    %9 = vsyncpa [#allocation6], 0
    %10 = vsyncpa [#allocation4], 0
    // Predicated region
    $region2: #{tpu_custom_call.1} parent=1 // pred_check
      _
    $region3: #{tpu_custom_call.1} parent=1 // pred_check_branch
      %12 = sbr.rel (0) target = $region5
    $region4: #{tpu_custom_call.1} parent=1 // pred_region
      %s14 = ssub.s32 576, 576
      %15 = vsyncadd [#allocation3], %s14
      %s17 = sshll.u32 [#allocation2], 4
      %s18 = int_to_ptr.vmem [resolvable:$true] %s17
      %20 = dma.hbm_to_vmem [thread:$0]  %s0, 576, %s18, [#allocation3]
    $region5: #{tpu_custom_call.1} parent=1 // pred_fallthru
      _
    // Predicated region
    $region6: #{tpu_custom_call.1} parent=1 // pred_check
      _
    $region7: #{tpu_custom_call.1} parent=1 // pred_check_branch
      %22 = sbr.rel (0) target = $region9
    $region8: #{tpu_custom_call.1} parent=1 // pred_region
      %s24 = ssub.s32 64, 64
      %25 = vsyncadd [#allocation6], %s24
      %s27 = sshll.u32 [#allocation5], 4
      %s28 = int_to_ptr.vmem [resolvable:$true] %s27
      %30 = dma.hbm_to_vmem [thread:$0]  %s1, 64, %s28, [#allocation6]
    $region9: #{tpu_custom_call.1} parent=1 // pred_fallthru
      _
    // Predicated region
    $region10: #{tpu_custom_call.1} parent=1 // pred_check
      _
    $region11: #{tpu_custom_call.1} parent=1 // pred_check_branch
      %32 = sbr.rel (0) target = $region13
    $region12: #{tpu_custom_call.1} parent=1 // pred_region
      _
    $region13: #{tpu_custom_call.1} parent=1 // pred_fallthru
      _
    // Predicated region
    $region14: #{tpu_custom_call.1} parent=1 // pred_check
      _
    $region15: #{tpu_custom_call.1} parent=1 // pred_check_branch
      %34 = sbr.rel (0) target = $region17
    $region16: #{tpu_custom_call.1} parent=1 // pred_region
      %35 = dma.done [#allocation3], 576
    $region17: #{tpu_custom_call.1} parent=1 // pred_fallthru
      _
    // Predicated region
    $region18: #{tpu_custom_call.1} parent=1 // pred_check
      _
    $region19: #{tpu_custom_call.1} parent=1 // pred_check_branch
      %37 = sbr.rel (0) target = $region21
    $region20: #{tpu_custom_call.1} parent=1 // pred_region
      %38 = dma.done [#allocation6], 64
    $region21: #{tpu_custom_call.1} parent=1 // pred_fallthru
      _
    %v39 = vld [vmem:[#allocation5] sm:$0x7]
    %v40 = vld [vmem:[%s2] sm:$0x1]
    %v41 = vld [vmem:[#allocation2] sm:$0xff]
    %v42 = vld [vmem:[#allocation2 + $0x8] sm:$0xf]
    %v45 = vcombine.high %v41, %v41
    %v47 = vunpack.c.l.s4 1983009808
    %v48 = vunpack.c.0.s8 %v47
    %v49 = vlaneseq
    %v50 = vshrl.u32 %v49, 7
    %v51 = vsub.s32 %v48, %v50
    %v52 = vrot.slane %v41, %v51
    %v54 = vunpack.c.l.s4 1983009808
    %v55 = vunpack.c.0.s8 %v54
    %v56 = vlaneseq
    %v57 = vshrl.u32 %v56, 7
    %v58 = vsub.s32 %v55, %v57
    %v59 = vrot.slane %v45, %v58
    %v60 = vcombine.high %v52, %v52
    %v61 = vcombine.high %v59, %v59
    %v63 = vunpack.c.l.s4 1983009808
    %v64 = vunpack.c.0.s8 %v63
    %v65 = vlaneseq
    %v66 = vshrl.u32 %v65, 7
    %v67 = vsub.s32 %v64, %v66
    %v68 = vrot.slane %v42, %v67
    %v69 = vcombine.high %v68, %v68
    %vm76 = vcmask 1041408
    %v77 = vsel %vm76, %v52, -inf
    %v78 = vsel %vm76, %v60, -inf
    %v79 = vsel %vm76, %v59, -inf
    %v80 = vsel %vm76, %v61, -inf
    %v81 = vsel %vm76, %v68, -inf
    %v82 = vmax.f32 %v77, %v81
    %vm83 = vcmask 721920
    %v84 = vsel %vm83, %v69, -inf
    %v85 = vmax.f32 %v78, %v84
    %v86 = vmax.f32 %v82, %v85
    %v87 = vmax.f32 %v79, %v80
    %v88 = vmax.f32 %v86, %v87
    %89 = vmax.xlane.f32.xlu0 %v88
    %v90 = vpop.xlane.xlu0 %89
    %v91 = vlaneseq
    %v92 = vshrl.u32 %v91, 7
    %v93 = vsub.s32 0, %v92
    %v94 = vrot.slane %v39, %v93
    %v95 = vmul.f32 %v90, %v94
    %v97 = vlaneseq
    %v98 = vshrl.u32 %v97, 7
    %v99 = vsub.s32 0, %v98
    %v100 = vrot.slane %v40, %v99
    %v102 = vadd.f32 %v100, %v95
    %v103 = vld [vmem:[#allocation2 + $0xa] sm:$0xff]
    %v104 = vld [vmem:[#allocation2 + $0x12] sm:$0x3f]
    %v107 = vcombine.high %v103, %v103
    %v109 = vunpack.c.l.s4 1983009808
    %v110 = vunpack.c.0.s8 %v109
    %v111 = vlaneseq
    %v112 = vshrl.u32 %v111, 7
    %v113 = vsub.s32 %v110, %v112
    %v114 = vrot.slane %v103, %v113
    %v116 = vunpack.c.l.s4 1983009808
    %v117 = vunpack.c.0.s8 %v116
    %v118 = vlaneseq
    %v119 = vshrl.u32 %v118, 7
    %v120 = vsub.s32 %v117, %v119
    %v121 = vrot.slane %v107, %v120
    %v122 = vcombine.high %v114, %v114
    %v123 = vcombine.high %v121, %v121
    %v124 = vcombine.high %v104, %v104
    %v126 = vunpack.c.l.s4 1983009808
    %v127 = vunpack.c.0.s8 %v126
    %v128 = vlaneseq
    %v129 = vshrl.u32 %v128, 7
    %v130 = vsub.s32 %v127, %v129
    %v131 = vrot.slane %v104, %v130
    %v133 = vunpack.c.l.s4 1983009808
    %v134 = vunpack.c.0.s8 %v133
    %v135 = vlaneseq
    %v136 = vshrl.u32 %v135, 7
    %v137 = vsub.s32 %v134, %v136
    %v138 = vrot.slane %v124, %v137
    %v139 = vcombine.high %v131, %v131
    %vm147 = vcmask 1042120
    %v148 = vsel %vm147, %v114, -inf
    %v149 = vsel %vm76, %v122, -inf
    %v150 = vsel %vm76, %v121, -inf
    %v151 = vsel %vm76, %v123, -inf
    %v152 = vsel %vm76, %v131, -inf
    %v153 = vmax.f32 %v148, %v152
    %v154 = vsel %vm76, %v139, -inf
    %v155 = vmax.f32 %v149, %v154
    %vm156 = vcmask 402432
    %v157 = vsel %vm156, %v138, -inf
    %v158 = vmax.f32 %v150, %v157
    %v159 = vmax.f32 %v153, %v155
    %v160 = vmax.f32 %v158, %v151
    %v161 = vmax.f32 %v159, %v160
    %162 = vmax.xlane.f32.xlu0 %v161
    %v163 = vpop.xlane.xlu0 %162
    %v164 = vlaneseq
    %v165 = vshrl.u32 %v164, 7
    %v166 = vsub.s32 1, %v165
    %v167 = vrot.slane %v39, %v166
    %v168 = vmul.f32 %v163, %v167
    %v169 = vadd.f32 %v102, %v168
    %v170 = vld [vmem:[#allocation2 + $0x16] sm:$0xff]
    %v171 = vld [vmem:[#allocation2 + $0x1e] sm:$0x3f]
    %v174 = vcombine.high %v170, %v170
    %v176 = vunpack.c.l.s4 1983009808
    %v177 = vunpack.c.0.s8 %v176
    %v178 = vlaneseq
    %v179 = vshrl.u32 %v178, 7
    %v180 = vsub.s32 %v177, %v179
    %v181 = vrot.slane %v170, %v180
    %v183 = vunpack.c.l.s4 1983009808
    %v184 = vunpack.c.0.s8 %v183
    %v185 = vlaneseq
    %v186 = vshrl.u32 %v185, 7
    %v187 = vsub.s32 %v184, %v186
    %v188 = vrot.slane %v174, %v187
    %v189 = vcombine.high %v181, %v181
    %v190 = vcombine.high %v188, %v188
    %v191 = vcombine.high %v171, %v171
    %v193 = vunpack.c.l.s4 1983009808
    %v194 = vunpack.c.0.s8 %v193
    %v195 = vlaneseq
    %v196 = vshrl.u32 %v195, 7
    %v197 = vsub.s32 %v194, %v196
    %v198 = vrot.slane %v171, %v197
    %v200 = vunpack.c.l.s4 1983009808
    %v201 = vunpack.c.0.s8 %v200
    %v202 = vlaneseq
    %v203 = vshrl.u32 %v202, 7
    %v204 = vsub.s32 %v201, %v203
    %v205 = vrot.slane %v191, %v204
    %v206 = vcombine.high %v198, %v198
    %vm214 = vcmask 1041808
    %v215 = vsel %vm214, %v181, -inf
    %v216 = vsel %vm76, %v189, -inf
    %v217 = vsel %vm76, %v188, -inf
    %v218 = vsel %vm76, %v190, -inf
    %v219 = vsel %vm76, %v198, -inf
    %v220 = vmax.f32 %v215, %v219
    %v221 = vsel %vm76, %v206, -inf
    %v222 = vmax.f32 %v216, %v221
    %vm223 = vcmask 82944
    %v224 = vsel %vm223, %v205, -inf
    %v225 = vmax.f32 %v217, %v224
    %v226 = vmax.f32 %v220, %v222
    %v227 = vmax.f32 %v225, %v218
    %v228 = vmax.f32 %v226, %v227
    %229 = vmax.xlane.f32.xlu0 %v228
    %v230 = vpop.xlane.xlu0 %229
    %v231 = vlaneseq
    %v232 = vshrl.u32 %v231, 7
    %v233 = vsub.s32 2, %v232
    %v234 = vrot.slane %v39, %v233
    %v235 = vmul.f32 %v230, %v234
    %v236 = vadd.f32 %v169, %v235
    %vm237 = vcmask 74752
    %238 = vst.msk [vmem:[#allocation7] sm:$0x3] %vm237, %v236
    // Predicated region
    $region22: #{tpu_custom_call.1} parent=1 // pred_check
      _
    $region23: #{tpu_custom_call.1} parent=1 // pred_check_branch
      %240 = sbr.rel (0) target = $region25
    $region24: #{tpu_custom_call.1} parent=1 // pred_region
      %s242 = ssub.s32 32, 32
      %243 = vsyncadd [#allocation4], %s242
      %s245 = sshll.u32 [#allocation7], 4
      %s246 = int_to_ptr.vmem [resolvable:$true] %s245
      %248 = dma.vmem_to_hbm [thread:$0]  %s246, 32, %s3, [#allocation4]
    $region25: #{tpu_custom_call.1} parent=1 // pred_fallthru
      _
    // Predicated region
    $region26: #{tpu_custom_call.1} parent=1 // pred_check
      _
    $region27: #{tpu_custom_call.1} parent=1 // pred_check_branch
      %250 = sbr.rel (0) target = $region29
    $region28: #{tpu_custom_call.1} parent=1 // pred_region
      %251 = dma.done [#allocation4], 32
    $region29: #{tpu_custom_call.1} parent=1 // pred_fallthru
      _
    %252 = vsyncpa [#allocation3], 1
    %253 = vsyncpa [#allocation6], 1
    %254 = vsyncpa [#allocation4], 1

</llo_original>
